<compile_context>
chip_gen: v7x
topology: tpu7x:2x2x1
jax: 0.10.0
libtpu: 0.0.40
codegen_flags: <defaults>
</compile_context>

<pallas_src>
import numpy as np
import jax
import jax.numpy as jnp
from jax.experimental import pallas as pl
from jax.experimental.pallas import tpu as pltpu


def _round_up(n, m):
    return ((n + m - 1) // m) * m


def _pe_kernel_factory(num_freqs, d_in, freq_factor, include_input, out_cols):
    """Kernel working on a (d_in, TB) input tile, batch along lanes."""
    half_pi = float(np.pi * 0.5)

    def kernel(xT_ref, out_ref):
        # xT_ref:  (d_in, TB)   x transposed, batch on the lane axis.
        # out_ref: (TB, d_out)  torch-interleaved rows, one per batch element.
        xb = xT_ref[...].astype(jnp.float32)            # compute in f32 (v5e VALU)
        TB = xb.shape[-1]

        # Build the sin argument for all 2*num_freqs slots as ONE dense slab
        # (2F*d_in, TB): ~90% vreg occupancy for the single fused jnp.sin.
        arg_pieces = []
        for k in range(num_freqs):
            f = float(freq_factor) * float(2.0 ** k)    # folded scalar constant
            y = xb * f                                  # shared by sin & cos slots
            arg_pieces.append(y)                        # sin(f_k * x)
            arg_pieces.append(y + half_pi)              # cos == sin(y + pi/2), as torch
        arg = jnp.concatenate(arg_pieces, axis=0)       # (2F*d_in, TB)
        s = jnp.sin(arg)                                # one dense EUP/VALU pass

        rows = ([xb] if include_input else []) + [s]    # (out_cols, TB) logical
        pad = (-out_cols) % 8                           # keep the transpose 8-aligned
        if pad:
            rows.append(jnp.zeros((pad, TB), jnp.float32))
        full = jnp.concatenate(rows, axis=0)            # (round_up(out_cols,8), TB)

        # In-VMEM relayout to the interleaved (batch, d_out) layout: one XLU
        # transpose per tile instead of an HBM round trip in XLA.
        t = jnp.transpose(full)                          # (TB, round_up(out_cols,8))
        out_ref[...] = t[:, :out_cols].astype(out_ref.dtype)

    return kernel


def positional_encoding_pallas(x, num_freqs=6, d_in=3, freq_factor=np.pi,
                               include_input=True, block_batch=2048,
                               out_dtype=None):
    """x: (batch, d_in) float32 -> (batch, d_out) in torch column order."""
    B, din = x.shape
    assert din == d_in, (din, d_in)
    d_out = 2 * num_freqs * d_in + (d_in if include_input else 0)
    out_dtype = x.dtype if out_dtype is None else out_dtype

    # Batch tile (lane dim of the compute slabs, sublane dim of the output
    # block) must be a multiple of 128.  Cap it so the grid has >= 2 steps
    # whenever the batch allows (v7x has 2 TensorCores on the parallel axis).
    tb_req = max(128, _round_up(block_batch, 128))
    TB = min(tb_req, max(128, _round_up(pl.cdiv(B, 2), 128)))
    Bp = _round_up(B, TB)
    grid = Bp // TB

    # 1x-sized layout plumbing: batch onto the lane axis (+ pad only if needed).
    xT = jnp.transpose(x)                                # (d_in, B)
    if Bp != B:
        xT = jnp.pad(xT, ((0, 0), (0, Bp - B)))

    kernel = _pe_kernel_factory(num_freqs, d_in, freq_factor, include_input, d_out)

    out = pl.pallas_call(
        kernel,
        out_shape=jax.ShapeDtypeStruct((Bp, d_out), out_dtype),
        grid_spec=pltpu.PrefetchScalarGridSpec(
            num_scalar_prefetch=0,
            grid=(grid,),
            in_specs=[pl.BlockSpec((d_in, TB), lambda i: (0, i))],
            out_specs=pl.BlockSpec((TB, d_out), lambda i: (i, 0)),
        ),
        compiler_params=pltpu.CompilerParams(
            dimension_semantics=("parallel",),
            vmem_limit_bytes=32 * 1024 * 1024),
    )(xT)

    if Bp != B:
        out = out[:B]
    return out


def positional_encoding_ref(x, num_freqs=6, d_in=3, freq_factor=np.pi,
                            include_input=True):
    """Pure-JAX reference mirroring the torch forward exactly."""
    B = x.shape[0]
    freqs = freq_factor * (2.0 ** jnp.arange(num_freqs, dtype=x.dtype))
    freqs = jnp.repeat(freqs, 2).reshape(1, -1, 1)                 # (1, 2F, 1)
    phases = jnp.zeros((2 * num_freqs,), dtype=x.dtype)
    phases = phases.at[1::2].set(np.pi * 0.5).reshape(1, -1, 1)    # (1, 2F, 1)
    embed = jnp.broadcast_to(x[:, None, :], (B, 2 * num_freqs, d_in))
    embed = jnp.sin(phases + embed * freqs)
    embed = embed.reshape(B, -1)
    if include_input:
        embed = jnp.concatenate([x, embed], axis=-1)
    return embed


def _check(x, **kw):
    out = jax.block_until_ready(positional_encoding_pallas(x, **kw))
    ref = positional_encoding_ref(
        x, num_freqs=kw.get("num_freqs", 6), d_in=kw.get("d_in", 3),
        freq_factor=kw.get("freq_factor", np.pi),
        include_input=kw.get("include_input", True))
    assert out.shape == ref.shape, (out.shape, ref.shape)
    # The Mosaic sin lowering differs slightly from XLA's (observed ~1.5e-5 max
    # abs diff at these argument ranges); tolerance leaves headroom across TPU
    # generations while still catching real bugs.
    np.testing.assert_allclose(np.asarray(out), np.asarray(ref),
                               rtol=5e-4, atol=5e-4)


if __name__ == "__main__":
    key = jax.random.PRNGKey(0)
    k1, k2, k3 = jax.random.split(key, 3)

    # Small canonical case: batch=16, d_in=3, num_freqs=6 -> d_out=39.
    x = jax.random.normal(k1, (16, 3), dtype=jnp.float32)
    _check(x, num_freqs=6, d_in=3, include_input=True)

    # include_input=False branch (d_out=24, transpose needs no row padding).
    _check(x, num_freqs=4, d_in=3, include_input=False)

    # Odd batch: pad + final slice path, 2 grid steps.
    x2 = jax.random.normal(k2, (777, 3), dtype=jnp.float32)
    _check(x2, num_freqs=6, d_in=3, include_input=True)

    # 128-divisible batch: no pad, no final slice, 2 parallel grid steps.
    x3 = jax.random.normal(k3, (1024, 3), dtype=jnp.float32)
    _check(x3, num_freqs=6, d_in=3, include_input=True)

    print("KERNEL_OK")
</pallas_src>

<mosaic_0001>
module attributes {stable_mosaic.version = 11 : i64} {
  func.func @kernel(%arg0: i32, %arg1: memref<3x128xf32, #tpu.memory_space<vmem>>, %arg2: memref<128x39xf32, #tpu.memory_space<vmem>>) attributes {dimension_semantics = [#tpu.dimension_semantics<parallel>], iteration_bounds = array<i64: 1>, scalar_prefetch = 0 : i64, scratch_operands = 0 : i64, tpu.core_type = #tpu.core_type<tc>, window_params = [{transform_indices = @transform_0, window_bounds = array<i64: 3, 128>}, {transform_indices = @transform_1, window_bounds = array<i64: 128, 39>}]} {
    %c0 = arith.constant 0 : index
    %c0_0 = arith.constant 0 : index
    %0 = vector.load %arg1[%c0, %c0_0] : memref<3x128xf32, #tpu.memory_space<vmem>>, vector<3x128xf32>
    %cst = arith.constant 3.14159274 : f32
    %1 = vector.broadcast %cst : f32 to vector<3x128xf32>
    %2 = arith.mulf %0, %1 : vector<3x128xf32>
    %cst_1 = arith.constant 1.57079637 : f32
    %3 = vector.broadcast %cst_1 : f32 to vector<3x128xf32>
    %4 = arith.addf %2, %3 : vector<3x128xf32>
    %cst_2 = arith.constant 6.28318548 : f32
    %5 = vector.broadcast %cst_2 : f32 to vector<3x128xf32>
    %6 = arith.mulf %0, %5 : vector<3x128xf32>
    %cst_3 = arith.constant 1.57079637 : f32
    %7 = vector.broadcast %cst_3 : f32 to vector<3x128xf32>
    %8 = arith.addf %6, %7 : vector<3x128xf32>
    %cst_4 = arith.constant 12.566371 : f32
    %9 = vector.broadcast %cst_4 : f32 to vector<3x128xf32>
    %10 = arith.mulf %0, %9 : vector<3x128xf32>
    %cst_5 = arith.constant 1.57079637 : f32
    %11 = vector.broadcast %cst_5 : f32 to vector<3x128xf32>
    %12 = arith.addf %10, %11 : vector<3x128xf32>
    %cst_6 = arith.constant 25.1327419 : f32
    %13 = vector.broadcast %cst_6 : f32 to vector<3x128xf32>
    %14 = arith.mulf %0, %13 : vector<3x128xf32>
    %cst_7 = arith.constant 1.57079637 : f32
    %15 = vector.broadcast %cst_7 : f32 to vector<3x128xf32>
    %16 = arith.addf %14, %15 : vector<3x128xf32>
    %cst_8 = arith.constant 50.2654839 : f32
    %17 = vector.broadcast %cst_8 : f32 to vector<3x128xf32>
    %18 = arith.mulf %0, %17 : vector<3x128xf32>
    %cst_9 = arith.constant 1.57079637 : f32
    %19 = vector.broadcast %cst_9 : f32 to vector<3x128xf32>
    %20 = arith.addf %18, %19 : vector<3x128xf32>
    %cst_10 = arith.constant 100.530968 : f32
    %21 = vector.broadcast %cst_10 : f32 to vector<3x128xf32>
    %22 = arith.mulf %0, %21 : vector<3x128xf32>
    %cst_11 = arith.constant 1.57079637 : f32
    %23 = vector.broadcast %cst_11 : f32 to vector<3x128xf32>
    %24 = arith.addf %22, %23 : vector<3x128xf32>
    %25 = tpu.concatenate %2, %4, %6, %8, %10, %12, %14, %16, %18, %20, %22, %24 in 0 : vector<3x128xf32>, vector<3x128xf32>, vector<3x128xf32>, vector<3x128xf32>, vector<3x128xf32>, vector<3x128xf32>, vector<3x128xf32>, vector<3x128xf32>, vector<3x128xf32>, vector<3x128xf32>, vector<3x128xf32>, vector<3x128xf32> -> vector<36x128xf32>
    %26 = math.sin %25 : vector<36x128xf32>
    %cst_12 = arith.constant 0.000000e+00 : f32
    %27 = vector.broadcast %cst_12 : f32 to vector<1x128xf32>
    %28 = tpu.concatenate %0, %26, %27 in 0 : vector<3x128xf32>, vector<36x128xf32>, vector<1x128xf32> -> vector<40x128xf32>
    %29 = tpu.transpose %28, [1, 0] : vector<40x128xf32> -> vector<128x40xf32>
    %30 = vector.extract_strided_slice %29 {offsets = [0, 0], sizes = [128, 39], strides = [1, 1]} : vector<128x40xf32> to vector<128x39xf32>
    %c0_13 = arith.constant 0 : index
    %c0_14 = arith.constant 0 : index
    %31 = vector.load %arg2[%c0_13, %c0_14] : memref<128x39xf32, #tpu.memory_space<vmem>>, vector<128x39xf32>
    tpu.vector_store %arg2[%c0_13, %c0_14], %30 {strides = array<i32>} : memref<128x39xf32, #tpu.memory_space<vmem>>, vector<128x39xf32>,
    return
  }
  func.func @transform_0(%arg0: i32) -> (i32, i32) {
    %c0_i32 = arith.constant 0 : i32
    %c0_i32_0 = arith.constant 0 : i32
    return %c0_i32, %arg0 : i32, i32
  }
  func.func @transform_1(%arg0: i32) -> (i32, i32) {
    %c0_i32 = arith.constant 0 : i32
    %c0_i32_0 = arith.constant 0 : i32
    return %arg0, %c0_i32 : i32, i32
  }
}

</mosaic_0001>

<llo_original>
// kernel: tpu_custom_call.1
$region0: #{tpu_custom_call.1}
  #allocation0 [shape = 'u32[]', space=smem, size = 0x4, offset = 0x4, fixed_abs, tag = 'smem constant byte address 0x4 - core index']
  #allocation1 [shape = 'u32[144,128]{1,0:T(1,128)}', space=vmem, size = 0x12000, scoped, tag = 'internal scratch']
  %s0 = inlined_call_operand.hbm [shape: f32[3,128], index: 0, kind: input, shape index: {}]
  %s1 = inlined_call_operand.vmem [shape: f32[128,39], index: 1, kind: output, shape index: {}]
  %s2 = sld [smem:[#allocation0]]
  $region18: #{tpu_custom_call.1} parent=0
    _
  %s4 = ssub.s32 1, %s2
  %s5 = scalar_select 0, %s4, %s2
  $region1: #{tpu_custom_call.1} parent=0
    #allocation2 [shape = 'u8[2048]{0}', space=vmem, size = 0x800, scoped, tag = 'input window, operand 0, single buffered']
    #allocation3 [shape = 's32[1]{0}', space=sflag, size = 0x4, scoped, tag = 'scoped memory for tpu_custom_call.1']
    %6 = vsyncpa [#allocation3], 0
    // Predicated region
    $region2: #{tpu_custom_call.1} parent=1 // pred_check
      _
    $region3: #{tpu_custom_call.1} parent=1 // pred_check_branch
      %8 = sbr.rel (0) target = $region5
    $region4: #{tpu_custom_call.1} parent=1 // pred_region
      %s10 = ssub.s32 64, 64
      %11 = vsyncadd [#allocation3], %s10
      %s13 = sshll.u32 [#allocation2], 4
      %s14 = int_to_ptr.vmem [resolvable:$true] %s13
      %16 = dma.hbm_to_vmem [thread:$0]  %s0, 64, %s14, [#allocation3]
    $region5: #{tpu_custom_call.1} parent=1 // pred_fallthru
      _
    // Predicated region
    $region6: #{tpu_custom_call.1} parent=1 // pred_check
      _
    $region7: #{tpu_custom_call.1} parent=1 // pred_check_branch
      %18 = sbr.rel (0) target = $region9
    $region8: #{tpu_custom_call.1} parent=1 // pred_region
      %19 = dma.done [#allocation3], 64
    $region9: #{tpu_custom_call.1} parent=1 // pred_fallthru
      _
    %v20 = vld [vmem:[#allocation2] sm:$0x7]
    %v21 = vmul.f32 %v20, 3.1415927
    %v22 = vadd.f32 %v21, 1.5707964
    %v23 = vmul.f32 %v20, 6.2831855
    %v24 = vadd.f32 %v23, 1.5707964
    %v25 = vmul.f32 %v20, 12.566371
    %v26 = vadd.f32 %v25, 1.5707964
    %v27 = vmul.f32 %v20, 25.132742
    %v28 = vadd.f32 %v27, 1.5707964
    %v29 = vmul.f32 %v20, 50.265484
    %v30 = vadd.f32 %v29, 1.5707964
    %v31 = vmul.f32 %v20, 100.53097
    %v32 = vadd.f32 %v31, 1.5707964
    %v34 = vrot.slane %v22, 5
    %v37 = vrot.slane %v23, 2
    %v40 = vrot.slane %v24, 7
    %v43 = vrot.slane %v25, 4
    %v46 = vrot.slane %v26, 1
    %v49 = vrot.slane %v27, 6
    %v52 = vrot.slane %v28, 3
    %v55 = vrot.slane %v30, 5
    %v58 = vrot.slane %v31, 2
    %v61 = vrot.slane %v32, 7
    %vm63 = vcmask 1042432
    %v64 = vsel %vm63, %v21, %v34
    %vm65 = vcmask 1045504
    %v66 = vsel %vm65, %v64, %v37
    %vm67 = vcmask 1040384
    %v68 = vsel %vm67, %v37, %v40
    %vm69 = vcmask 1043456
    %v70 = vsel %vm69, %v68, %v43
    %vm71 = vcmask 1046528
    %v72 = vsel %vm71, %v70, %v46
    %vm73 = vcmask 1041408
    %v74 = vsel %vm73, %v46, %v49
    %vm75 = vcmask 1044480
    %v76 = vsel %vm75, %v74, %v52
    %v77 = vsel %vm63, %v29, %v55
    %v78 = vsel %vm65, %v77, %v58
    %v79 = vsel %vm67, %v58, %v61
    %v80 = vand.u32 2147483647, %v66
    %vm81 = vcmp.le.f32.partialorder %v80, 0.7853982
    %vm82 = vcmp.lt.s32.totalorder %v66, 0
    %v83 = vand.u32 %v66, 2139095040
    %v84 = vshrl.u32 %v83, 23
    %v85 = vsub.s32 %v84, 127
    %v86 = vand.u32 2147483647, %v66
    %v87 = vand.u32 %v86, 8388607
    %v88 = vor.u32 %v87, 8388608
    %v89 = vsub.s32 0, %v88
    %v90 = vadd.s32 %v85, 1
    %vm91 = vcmp.gt.s32.totalorder %v90, 0
    %v92 = vsel %vm91, %v90, 0
    %v93 = vshrl.u32 %v92, 5
    %v94 = vand.u32 %v92, 31
    %v95 = vsub.s32 32, %v94
    %v96 = vshrl.u32 683565275, %v95
    %v97 = vshll.u32 683565275, %v94
    %v98 = vshrl.u32 2475754826, %v95
    %v99 = vor.u32 %v97, %v98
    %v100 = vshll.u32 2475754826, %v94
    %v101 = vshrl.u32 2131351028, %v95
    %v102 = vor.u32 %v100, %v101
    %v103 = vshll.u32 2131351028, %v94
    %v104 = vshrl.u32 2102212464, %v95
    %v105 = vor.u32 %v103, %v104
    %v106 = vshll.u32 2102212464, %v94
    %v107 = vshrl.u32 920167782, %v95
    %v108 = vor.u32 %v106, %v107
    %v109 = vshll.u32 920167782, %v94
    %v110 = vshrl.u32 1326507024, %v95
    %v111 = vor.u32 %v109, %v110
    %vm112 = vcmp.lt.s32.totalorder %v93, 1
    %vm113 = vcmp.lt.s32.totalorder %v93, 2
    %vm114 = vcmp.lt.s32.totalorder %v93, 3
    %vm115 = vcmp.lt.s32.totalorder %v93, 4
    %v116 = vsel %vm112, %v96, %v99
    %v117 = vsel %vm115, %v105, 2102212464
    %v118 = vsel %vm114, %v102, %v117
    %v119 = vsel %vm113, %v116, %v118
    %v120 = vsel %vm112, %v99, %v102
    %v121 = vsel %vm115, %v108, 920167782
    %v122 = vsel %vm114, %v105, %v121
    %v123 = vsel %vm113, %v120, %v122
    %v124 = vsel %vm112, %v102, %v105
    %v125 = vsel %vm115, %v111, 1326507024
    %v126 = vsel %vm114, %v108, %v125
    %v127 = vsel %vm113, %v124, %v126
    %v128 = vshll.u32 %v88, 8
    %v129 = vmul.u32.u64.compose %v128, %v127
    %v130 = vextract.low.u32 %v129
    %v131 = vextract.high.u32 %v129
    %v132 = vmul.u32.u64.compose %v128, %v123
    %v133 = vextract.low.u32 %v132
    %v134 = vextract.high.u32 %v132
    %v135 = vmul.u32 %v128, %v119
    %v136 = vadd.s32 %v131, %v133
    %vm137 = vc.u32 %v131, %v133
    %v138 = vadd.s32 %v134, 1
    %v139 = vsel %vm137, %v138, %v134
    %v140 = vadd.s32 %v135, %v139
    %v141 = vadd.s32 %v140, 536870912
    %v142 = vshrl.u32 %v141, 30
    %v143 = vshll.u32 %v142, 30
    %v144 = vsub.s32 %v140, %v143
    %vm145 = vcmp.lt.s32.totalorder %v144, 0
    %v146 = vsub.s32 0, %v144
    %v147 = vsel %vm145, %v146, %v144
    %v148 = vclz %v147
    %v149 = vsub.s32 %v148, 2
    %vm150 = vcmp.gt.s32.totalorder 0, %v149
    %v151 = vsel %vm150, 0, %v149
    %v152 = vsub.s32 32, %v151
    %v153 = vshll.u32 %v144, %v151
    %v154 = vshrl.u32 %v136, %v152
    %v155 = vor.u32 %v153, %v154
    %v156 = vsub.s32 4294967266, %v151
    %v157 = vadd.s32 %v156, 127
    %v158 = vshll.u32 %v157, 23
    %v159 = vor.u32 4788187, %v158
    %v160 = vand.u32 2147483647, %v159
    %v162 = vcvt.s32.f32 %v155
    %v163 = vmul.f32 %v162, %v160
    %v164 = vxor.u32 %v163, 2147483648
    %v165 = vsel %vm82, %v164, %v163
    %v166 = vsub.s32 4, %v142
    %v167 = vsel %vm82, %v166, %v142
    %v168 = vsel %vm81, %v66, %v165
    %v169 = vsel %vm81, 0, %v167
    %v170 = vcosq.f32.pop %v168
    %v171 = vsinq.f32.pop %v168
    %vm172 = vweird.f32 %v66
    %v173 = vadd.s32 %v169, 3
    %v174 = vand.u32 %v173, 3
    %vm175 = vcmp.lt.s32.totalorder %v174, 2
    %vm176 = vcmp.eq.s32.totalorder %v174, 0
    %v177 = vxor.u32 %v171, 2147483648
    %v178 = vsel %vm176, %v170, %v177
    %vm179 = vcmp.eq.s32.totalorder %v174, 2
    %v180 = vxor.u32 %v170, 2147483648
    %v181 = vsel %vm179, %v180, %v171
    %v182 = vsel %vm175, %v178, %v181
    %v183 = vsel %vm172, nan, %v182
    %v184 = vand.u32 2147483647, %v72
    %vm185 = vcmp.le.f32.partialorder %v184, 0.7853982
    %vm186 = vcmp.lt.s32.totalorder %v72, 0
    %v187 = vand.u32 %v72, 2139095040
    %v188 = vshrl.u32 %v187, 23
    %v189 = vsub.s32 %v188, 127
    %v190 = vand.u32 2147483647, %v72
    %v191 = vand.u32 %v190, 8388607
    %v192 = vor.u32 %v191, 8388608
    %v193 = vsub.s32 0, %v192
    %v194 = vadd.s32 %v189, 1
    %vm195 = vcmp.gt.s32.totalorder %v194, 0
    %v196 = vsel %vm195, %v194, 0
    %v197 = vshrl.u32 %v196, 5
    %v198 = vand.u32 %v196, 31
    %v199 = vsub.s32 32, %v198
    %v200 = vshrl.u32 683565275, %v199
    %v201 = vshll.u32 683565275, %v198
    %v202 = vshrl.u32 2475754826, %v199
    %v203 = vor.u32 %v201, %v202
    %v204 = vshll.u32 2475754826, %v198
    %v205 = vshrl.u32 2131351028, %v199
    %v206 = vor.u32 %v204, %v205
    %v207 = vshll.u32 2131351028, %v198
    %v208 = vshrl.u32 2102212464, %v199
    %v209 = vor.u32 %v207, %v208
    %v210 = vshll.u32 2102212464, %v198
    %v211 = vshrl.u32 920167782, %v199
    %v212 = vor.u32 %v210, %v211
    %v213 = vshll.u32 920167782, %v198
    %v214 = vshrl.u32 1326507024, %v199
    %v215 = vor.u32 %v213, %v214
    %vm216 = vcmp.lt.s32.totalorder %v197, 1
    %vm217 = vcmp.lt.s32.totalorder %v197, 2
    %vm218 = vcmp.lt.s32.totalorder %v197, 3
    %vm219 = vcmp.lt.s32.totalorder %v197, 4
    %v220 = vsel %vm216, %v200, %v203
    %v221 = vsel %vm219, %v209, 2102212464
    %v222 = vsel %vm218, %v206, %v221
    %v223 = vsel %vm217, %v220, %v222
    %v224 = vsel %vm216, %v203, %v206
    %v225 = vsel %vm219, %v212, 920167782
    %v226 = vsel %vm218, %v209, %v225
    %v227 = vsel %vm217, %v224, %v226
    %v228 = vsel %vm216, %v206, %v209
    %v229 = vsel %vm219, %v215, 1326507024
    %v230 = vsel %vm218, %v212, %v229
    %v231 = vsel %vm217, %v228, %v230
    %v232 = vshll.u32 %v192, 8
    %v233 = vmul.u32.u64.compose %v232, %v231
    %v234 = vextract.low.u32 %v233
    %v235 = vextract.high.u32 %v233
    %v236 = vmul.u32.u64.compose %v232, %v227
    %v237 = vextract.low.u32 %v236
    %v238 = vextract.high.u32 %v236
    %v239 = vmul.u32 %v232, %v223
    %v240 = vadd.s32 %v235, %v237
    %vm241 = vc.u32 %v235, %v237
    %v242 = vadd.s32 %v238, 1
    %v243 = vsel %vm241, %v242, %v238
    %v244 = vadd.s32 %v239, %v243
    %v245 = vadd.s32 %v244, 536870912
    %v246 = vshrl.u32 %v245, 30
    %v247 = vshll.u32 %v246, 30
    %v248 = vsub.s32 %v244, %v247
    %vm249 = vcmp.lt.s32.totalorder %v248, 0
    %v250 = vsub.s32 0, %v248
    %v251 = vsel %vm249, %v250, %v248
    %v252 = vclz %v251
    %v253 = vsub.s32 %v252, 2
    %vm254 = vcmp.gt.s32.totalorder 0, %v253
    %v255 = vsel %vm254, 0, %v253
    %v256 = vsub.s32 32, %v255
    %v257 = vshll.u32 %v248, %v255
    %v258 = vshrl.u32 %v240, %v256
    %v259 = vor.u32 %v257, %v258
    %v260 = vsub.s32 4294967266, %v255
    %v261 = vadd.s32 %v260, 127
    %v262 = vshll.u32 %v261, 23
    %v263 = vor.u32 4788187, %v262
    %v264 = vand.u32 2147483647, %v263
    %v266 = vcvt.s32.f32 %v259
    %v267 = vmul.f32 %v266, %v264
    %v268 = vxor.u32 %v267, 2147483648
    %v269 = vsel %vm186, %v268, %v267
    %v270 = vsub.s32 4, %v246
    %v271 = vsel %vm186, %v270, %v246
    %v272 = vsel %vm185, %v72, %v269
    %v273 = vsel %vm185, 0, %v271
    %v274 = vcosq.f32.pop %v272
    %v275 = vsinq.f32.pop %v272
    %vm276 = vweird.f32 %v72
    %v277 = vadd.s32 %v273, 3
    %v278 = vand.u32 %v277, 3
    %vm279 = vcmp.lt.s32.totalorder %v278, 2
    %vm280 = vcmp.eq.s32.totalorder %v278, 0
    %v281 = vxor.u32 %v275, 2147483648
    %v282 = vsel %vm280, %v274, %v281
    %vm283 = vcmp.eq.s32.totalorder %v278, 2
    %v284 = vxor.u32 %v274, 2147483648
    %v285 = vsel %vm283, %v284, %v275
    %v286 = vsel %vm279, %v282, %v285
    %v287 = vsel %vm276, nan, %v286
    %v288 = vand.u32 2147483647, %v76
    %vm289 = vcmp.le.f32.partialorder %v288, 0.7853982
    %vm290 = vcmp.lt.s32.totalorder %v76, 0
    %v291 = vand.u32 %v76, 2139095040
    %v292 = vshrl.u32 %v291, 23
    %v293 = vsub.s32 %v292, 127
    %v294 = vand.u32 2147483647, %v76
    %v295 = vand.u32 %v294, 8388607
    %v296 = vor.u32 %v295, 8388608
    %v297 = vsub.s32 0, %v296
    %v298 = vadd.s32 %v293, 1
    %vm299 = vcmp.gt.s32.totalorder %v298, 0
    %v300 = vsel %vm299, %v298, 0
    %v301 = vshrl.u32 %v300, 5
    %v302 = vand.u32 %v300, 31
    %v303 = vsub.s32 32, %v302
    %v304 = vshrl.u32 683565275, %v303
    %v305 = vshll.u32 683565275, %v302
    %v306 = vshrl.u32 2475754826, %v303
    %v307 = vor.u32 %v305, %v306
    %v308 = vshll.u32 2475754826, %v302
    %v309 = vshrl.u32 2131351028, %v303
    %v310 = vor.u32 %v308, %v309
    %v311 = vshll.u32 2131351028, %v302
    %v312 = vshrl.u32 2102212464, %v303
    %v313 = vor.u32 %v311, %v312
    %v314 = vshll.u32 2102212464, %v302
    %v315 = vshrl.u32 920167782, %v303
    %v316 = vor.u32 %v314, %v315
    %v317 = vshll.u32 920167782, %v302
    %v318 = vshrl.u32 1326507024, %v303
    %v319 = vor.u32 %v317, %v318
    %vm320 = vcmp.lt.s32.totalorder %v301, 1
    %vm321 = vcmp.lt.s32.totalorder %v301, 2
    %vm322 = vcmp.lt.s32.totalorder %v301, 3
    %vm323 = vcmp.lt.s32.totalorder %v301, 4
    %v324 = vsel %vm320, %v304, %v307
    %v325 = vsel %vm323, %v313, 2102212464
    %v326 = vsel %vm322, %v310, %v325
    %v327 = vsel %vm321, %v324, %v326
    %v328 = vsel %vm320, %v307, %v310
    %v329 = vsel %vm323, %v316, 920167782
    %v330 = vsel %vm322, %v313, %v329
    %v331 = vsel %vm321, %v328, %v330
    %v332 = vsel %vm320, %v310, %v313
    %v333 = vsel %vm323, %v319, 1326507024
    %v334 = vsel %vm322, %v316, %v333
    %v335 = vsel %vm321, %v332, %v334
    %v336 = vshll.u32 %v296, 8
    %v337 = vmul.u32.u64.compose %v336, %v335
    %v338 = vextract.low.u32 %v337
    %v339 = vextract.high.u32 %v337
    %v340 = vmul.u32.u64.compose %v336, %v331
    %v341 = vextract.low.u32 %v340
    %v342 = vextract.high.u32 %v340
    %v343 = vmul.u32 %v336, %v327
    %v344 = vadd.s32 %v339, %v341
    %vm345 = vc.u32 %v339, %v341
    %v346 = vadd.s32 %v342, 1
    %v347 = vsel %vm345, %v346, %v342
    %v348 = vadd.s32 %v343, %v347
    %v349 = vadd.s32 %v348, 536870912
    %v350 = vshrl.u32 %v349, 30
    %v351 = vshll.u32 %v350, 30
    %v352 = vsub.s32 %v348, %v351
    %vm353 = vcmp.lt.s32.totalorder %v352, 0
    %v354 = vsub.s32 0, %v352
    %v355 = vsel %vm353, %v354, %v352
    %v356 = vclz %v355
    %v357 = vsub.s32 %v356, 2
    %vm358 = vcmp.gt.s32.totalorder 0, %v357
    %v359 = vsel %vm358, 0, %v357
    %v360 = vsub.s32 32, %v359
    %v361 = vshll.u32 %v352, %v359
    %v362 = vshrl.u32 %v344, %v360
    %v363 = vor.u32 %v361, %v362
    %v364 = vsub.s32 4294967266, %v359
    %v365 = vadd.s32 %v364, 127
    %v366 = vshll.u32 %v365, 23
    %v367 = vor.u32 4788187, %v366
    %v368 = vand.u32 2147483647, %v367
    %v370 = vcvt.s32.f32 %v363
    %v371 = vmul.f32 %v370, %v368
    %v372 = vxor.u32 %v371, 2147483648
    %v373 = vsel %vm290, %v372, %v371
    %v374 = vsub.s32 4, %v350
    %v375 = vsel %vm290, %v374, %v350
    %v376 = vsel %vm289, %v76, %v373
    %v377 = vsel %vm289, 0, %v375
    %v378 = vcosq.f32.pop %v376
    %v379 = vsinq.f32.pop %v376
    %vm380 = vweird.f32 %v76
    %v381 = vadd.s32 %v377, 3
    %v382 = vand.u32 %v381, 3
    %vm383 = vcmp.lt.s32.totalorder %v382, 2
    %vm384 = vcmp.eq.s32.totalorder %v382, 0
    %v385 = vxor.u32 %v379, 2147483648
    %v386 = vsel %vm384, %v378, %v385
    %vm387 = vcmp.eq.s32.totalorder %v382, 2
    %v388 = vxor.u32 %v378, 2147483648
    %v389 = vsel %vm387, %v388, %v379
    %v390 = vsel %vm383, %v386, %v389
    %v391 = vsel %vm380, nan, %v390
    %v392 = vand.u32 2147483647, %v78
    %vm393 = vcmp.le.f32.partialorder %v392, 0.7853982
    %vm394 = vcmp.lt.s32.totalorder %v78, 0
    %v395 = vand.u32 %v78, 2139095040
    %v396 = vshrl.u32 %v395, 23
    %v397 = vsub.s32 %v396, 127
    %v398 = vand.u32 2147483647, %v78
    %v399 = vand.u32 %v398, 8388607
    %v400 = vor.u32 %v399, 8388608
    %v401 = vsub.s32 0, %v400
    %v402 = vadd.s32 %v397, 1
    %vm403 = vcmp.gt.s32.totalorder %v402, 0
    %v404 = vsel %vm403, %v402, 0
    %v405 = vshrl.u32 %v404, 5
    %v406 = vand.u32 %v404, 31
    %v407 = vsub.s32 32, %v406
    %v408 = vshrl.u32 683565275, %v407
    %v409 = vshll.u32 683565275, %v406
    %v410 = vshrl.u32 2475754826, %v407
    %v411 = vor.u32 %v409, %v410
    %v412 = vshll.u32 2475754826, %v406
    %v413 = vshrl.u32 2131351028, %v407
    %v414 = vor.u32 %v412, %v413
    %v415 = vshll.u32 2131351028, %v406
    %v416 = vshrl.u32 2102212464, %v407
    %v417 = vor.u32 %v415, %v416
    %v418 = vshll.u32 2102212464, %v406
    %v419 = vshrl.u32 920167782, %v407
    %v420 = vor.u32 %v418, %v419
    %v421 = vshll.u32 920167782, %v406
    %v422 = vshrl.u32 1326507024, %v407
    %v423 = vor.u32 %v421, %v422
    %vm424 = vcmp.lt.s32.totalorder %v405, 1
    %vm425 = vcmp.lt.s32.totalorder %v405, 2
    %vm426 = vcmp.lt.s32.totalorder %v405, 3
    %vm427 = vcmp.lt.s32.totalorder %v405, 4
    %v428 = vsel %vm424, %v408, %v411
    %v429 = vsel %vm427, %v417, 2102212464
    %v430 = vsel %vm426, %v414, %v429
    %v431 = vsel %vm425, %v428, %v430
    %v432 = vsel %vm424, %v411, %v414
    %v433 = vsel %vm427, %v420, 920167782
    %v434 = vsel %vm426, %v417, %v433
    %v435 = vsel %vm425, %v432, %v434
    %v436 = vsel %vm424, %v414, %v417
    %v437 = vsel %vm427, %v423, 1326507024
    %v438 = vsel %vm426, %v420, %v437
    %v439 = vsel %vm425, %v436, %v438
    %v440 = vshll.u32 %v400, 8
    %v441 = vmul.u32.u64.compose %v440, %v439
    %v442 = vextract.low.u32 %v441
    %v443 = vextract.high.u32 %v441
    %v444 = vmul.u32.u64.compose %v440, %v435
    %v445 = vextract.low.u32 %v444
    %v446 = vextract.high.u32 %v444
    %v447 = vmul.u32 %v440, %v431
    %v448 = vadd.s32 %v443, %v445
    %vm449 = vc.u32 %v443, %v445
    %v450 = vadd.s32 %v446, 1
    %v451 = vsel %vm449, %v450, %v446
    %v452 = vadd.s32 %v447, %v451
    %v453 = vadd.s32 %v452, 536870912
    %v454 = vshrl.u32 %v453, 30
    %v455 = vshll.u32 %v454, 30
    %v456 = vsub.s32 %v452, %v455
    %vm457 = vcmp.lt.s32.totalorder %v456, 0
    %v458 = vsub.s32 0, %v456
    %v459 = vsel %vm457, %v458, %v456
    %v460 = vclz %v459
    %v461 = vsub.s32 %v460, 2
    %vm462 = vcmp.gt.s32.totalorder 0, %v461
    %v463 = vsel %vm462, 0, %v461
    %v464 = vsub.s32 32, %v463
    %v465 = vshll.u32 %v456, %v463
    %v466 = vshrl.u32 %v448, %v464
    %v467 = vor.u32 %v465, %v466
    %v468 = vsub.s32 4294967266, %v463
    %v469 = vadd.s32 %v468, 127
    %v470 = vshll.u32 %v469, 23
    %v471 = vor.u32 4788187, %v470
    %v472 = vand.u32 2147483647, %v471
    %v474 = vcvt.s32.f32 %v467
    %v475 = vmul.f32 %v474, %v472
    %v476 = vxor.u32 %v475, 2147483648
    %v477 = vsel %vm394, %v476, %v475
    %v478 = vsub.s32 4, %v454
    %v479 = vsel %vm394, %v478, %v454
    %v480 = vsel %vm393, %v78, %v477
    %v481 = vsel %vm393, 0, %v479
    %v482 = vcosq.f32.pop %v480
    %v483 = vsinq.f32.pop %v480
    %vm484 = vweird.f32 %v78
    %v485 = vadd.s32 %v481, 3
    %v486 = vand.u32 %v485, 3
    %vm487 = vcmp.lt.s32.totalorder %v486, 2
    %vm488 = vcmp.eq.s32.totalorder %v486, 0
    %v489 = vxor.u32 %v483, 2147483648
    %v490 = vsel %vm488, %v482, %v489
    %vm491 = vcmp.eq.s32.totalorder %v486, 2
    %v492 = vxor.u32 %v482, 2147483648
    %v493 = vsel %vm491, %v492, %v483
    %v494 = vsel %vm487, %v490, %v493
    %v495 = vsel %vm484, nan, %v494
    %v496 = vand.u32 2147483647, %v79
    %vm497 = vcmp.le.f32.partialorder %v496, 0.7853982
    %vm498 = vcmp.lt.s32.totalorder %v79, 0
    %v499 = vand.u32 %v79, 2139095040
    %v500 = vshrl.u32 %v499, 23
    %v501 = vsub.s32 %v500, 127
    %v502 = vand.u32 2147483647, %v79
    %v503 = vand.u32 %v502, 8388607
    %v504 = vor.u32 %v503, 8388608
    %v505 = vsub.s32 0, %v504
    %v506 = vadd.s32 %v501, 1
    %vm507 = vcmp.gt.s32.totalorder %v506, 0
    %v508 = vsel %vm507, %v506, 0
    %v509 = vshrl.u32 %v508, 5
    %v510 = vand.u32 %v508, 31
    %v511 = vsub.s32 32, %v510
    %v512 = vshrl.u32 683565275, %v511
    %v513 = vshll.u32 683565275, %v510
    %v514 = vshrl.u32 2475754826, %v511
    %v515 = vor.u32 %v513, %v514
    %v516 = vshll.u32 2475754826, %v510
    %v517 = vshrl.u32 2131351028, %v511
    %v518 = vor.u32 %v516, %v517
    %v519 = vshll.u32 2131351028, %v510
    %v520 = vshrl.u32 2102212464, %v511
    %v521 = vor.u32 %v519, %v520
    %v522 = vshll.u32 2102212464, %v510
    %v523 = vshrl.u32 920167782, %v511
    %v524 = vor.u32 %v522, %v523
    %v525 = vshll.u32 920167782, %v510
    %v526 = vshrl.u32 1326507024, %v511
    %v527 = vor.u32 %v525, %v526
    %vm528 = vcmp.lt.s32.totalorder %v509, 1
    %vm529 = vcmp.lt.s32.totalorder %v509, 2
    %vm530 = vcmp.lt.s32.totalorder %v509, 3
    %vm531 = vcmp.lt.s32.totalorder %v509, 4
    %v532 = vsel %vm528, %v512, %v515
    %v533 = vsel %vm531, %v521, 2102212464
    %v534 = vsel %vm530, %v518, %v533
    %v535 = vsel %vm529, %v532, %v534
    %v536 = vsel %vm528, %v515, %v518
    %v537 = vsel %vm531, %v524, 920167782
    %v538 = vsel %vm530, %v521, %v537
    %v539 = vsel %vm529, %v536, %v538
    %v540 = vsel %vm528, %v518, %v521
    %v541 = vsel %vm531, %v527, 1326507024
    %v542 = vsel %vm530, %v524, %v541
    %v543 = vsel %vm529, %v540, %v542
    %v544 = vshll.u32 %v504, 8
    %v545 = vmul.u32.u64.compose %v544, %v543
    %v546 = vextract.low.u32 %v545
    %v547 = vextract.high.u32 %v545
    %v548 = vmul.u32.u64.compose %v544, %v539
    %v549 = vextract.low.u32 %v548
    %v550 = vextract.high.u32 %v548
    %v551 = vmul.u32 %v544, %v535
    %v552 = vadd.s32 %v547, %v549
    %vm553 = vc.u32 %v547, %v549
    %v554 = vadd.s32 %v550, 1
    %v555 = vsel %vm553, %v554, %v550
    %v556 = vadd.s32 %v551, %v555
    %v557 = vadd.s32 %v556, 536870912
    %v558 = vshrl.u32 %v557, 30
    %v559 = vshll.u32 %v558, 30
    %v560 = vsub.s32 %v556, %v559
    %vm561 = vcmp.lt.s32.totalorder %v560, 0
    %v562 = vsub.s32 0, %v560
    %v563 = vsel %vm561, %v562, %v560
    %v564 = vclz %v563
    %v565 = vsub.s32 %v564, 2
    %vm566 = vcmp.gt.s32.totalorder 0, %v565
    %v567 = vsel %vm566, 0, %v565
    %v568 = vsub.s32 32, %v567
    %v569 = vshll.u32 %v560, %v567
    %v570 = vshrl.u32 %v552, %v568
    %v571 = vor.u32 %v569, %v570
    %v572 = vsub.s32 4294967266, %v567
    %v573 = vadd.s32 %v572, 127
    %v574 = vshll.u32 %v573, 23
    %v575 = vor.u32 4788187, %v574
    %v576 = vand.u32 2147483647, %v575
    %v578 = vcvt.s32.f32 %v571
    %v579 = vmul.f32 %v578, %v576
    %v580 = vxor.u32 %v579, 2147483648
    %v581 = vsel %vm498, %v580, %v579
    %v582 = vsub.s32 4, %v558
    %v583 = vsel %vm498, %v582, %v558
    %v584 = vsel %vm497, %v79, %v581
    %v585 = vsel %vm497, 0, %v583
    %v586 = vcosq.f32.pop %v584
    %v587 = vsinq.f32.pop %v584
    %vm588 = vweird.f32 %v79
    %v589 = vadd.s32 %v585, 3
    %v590 = vand.u32 %v589, 3
    %vm591 = vcmp.lt.s32.totalorder %v590, 2
    %vm592 = vcmp.eq.s32.totalorder %v590, 0
    %v593 = vxor.u32 %v587, 2147483648
    %v594 = vsel %vm592, %v586, %v593
    %vm595 = vcmp.eq.s32.totalorder %v590, 2
    %v596 = vxor.u32 %v586, 2147483648
    %v597 = vsel %vm595, %v596, %v587
    %v598 = vsel %vm591, %v594, %v597
    %v599 = vsel %vm588, nan, %v598
    %v605 = vrot.slane %v183, 5
    %v606 = vrot.slane %v287, 5
    %v607 = vsel %vm63, %v605, %v606
    %v608 = vrot.slane %v391, 5
    %v609 = vsel %vm63, %v606, %v608
    %v610 = vrot.slane %v495, 5
    %v611 = vsel %vm63, %v608, %v610
    %v612 = vrot.slane %v599, 5
    %v613 = vsel %vm63, %v610, %v612
    %v619 = vsel %vm63, %v20, %v605
    %v620 = vsel %vm71, %v613, 0.0
    %621 = vxpose.xlu0.b32.start [1/16] %v619, 128
    %622 = vxpose.xlu0.b32.cont [2/16] %v607, 128
    %623 = vxpose.xlu0.b32.cont [3/16] %v609, 128
    %624 = vxpose.xlu0.b32.cont [4/16] %v611, 128
    %625 = vxpose.xlu0.b32.cont [5/16] %v620, 128
    %626 = vxpose.xlu0.b32.cont [6/16] 0.0, 128
    %627 = vxpose.xlu0.b32.cont [7/16] 0.0, 128
    %628 = vxpose.xlu0.b32.cont [8/16] 0.0, 128
    %629 = vxpose.xlu0.b32.cont [9/16] 0.0, 128
    %630 = vxpose.xlu0.b32.cont [10/16] 0.0, 128
    %631 = vxpose.xlu0.b32.cont [11/16] 0.0, 128
    %632 = vxpose.xlu0.b32.cont [12/16] 0.0, 128
    %633 = vxpose.xlu0.b32.cont [13/16] 0.0, 128
    %634 = vxpose.xlu0.b32.cont [14/16] 0.0, 128
    %635 = vxpose.xlu0.b32.cont [15/16] 0.0, 128
    %636 = vxpose.xlu0.b32.end [16/16] 0.0, 128
    %v637 = vpop.trf.xlu0
    %v638 = vpop.trf.xlu0
    %v639 = vpop.trf.xlu0
    %v640 = vpop.trf.xlu0
    %v641 = vpop.trf.xlu0
    %v642 = vpop.trf.xlu0
    %v643 = vpop.trf.xlu0
    %v644 = vpop.trf.xlu0
    %v645 = vpop.trf.xlu0
    %v646 = vpop.trf.xlu0
    %v647 = vpop.trf.xlu0
    %v648 = vpop.trf.xlu0
    %v649 = vpop.trf.xlu0
    %v650 = vpop.trf.xlu0
    %v651 = vpop.trf.xlu0
    %v652 = vpop.trf.xlu0
    %vm653 = vcmask 318464
    %654 = vst.msk [vmem:[%s1] sm:$0xff] %vm653, %v637
    %655 = vst.msk [vmem:[%s1 + $0x8] sm:$0xff] %vm653, %v638
    %656 = vst.msk [vmem:[%s1 + $0x10] sm:$0xff] %vm653, %v639
    %657 = vst.msk [vmem:[%s1 + $0x18] sm:$0xff] %vm653, %v640
    %658 = vst.msk [vmem:[%s1 + $0x20] sm:$0xff] %vm653, %v641
    %659 = vst.msk [vmem:[%s1 + $0x28] sm:$0xff] %vm653, %v642
    %660 = vst.msk [vmem:[%s1 + $0x30] sm:$0xff] %vm653, %v643
    %661 = vst.msk [vmem:[%s1 + $0x38] sm:$0xff] %vm653, %v644
    %662 = vst.msk [vmem:[%s1 + $0x40] sm:$0xff] %vm653, %v645
    %663 = vst.msk [vmem:[%s1 + $0x48] sm:$0xff] %vm653, %v646
    %664 = vst.msk [vmem:[%s1 + $0x50] sm:$0xff] %vm653, %v647
    %665 = vst.msk [vmem:[%s1 + $0x58] sm:$0xff] %vm653, %v648
    %666 = vst.msk [vmem:[%s1 + $0x60] sm:$0xff] %vm653, %v649
    %667 = vst.msk [vmem:[%s1 + $0x68] sm:$0xff] %vm653, %v650
    %668 = vst.msk [vmem:[%s1 + $0x70] sm:$0xff] %vm653, %v651
    %669 = vst.msk [vmem:[%s1 + $0x78] sm:$0xff] %vm653, %v652
    // Predicated region
    $region10: #{tpu_custom_call.1} parent=1 // pred_check
      _
    $region11: #{tpu_custom_call.1} parent=1 // pred_check_branch
      %671 = sbr.rel (0) target = $region13
    $region12: #{tpu_custom_call.1} parent=1 // pred_region
      _
    $region13: #{tpu_custom_call.1} parent=1 // pred_fallthru
      _
    // Predicated region
    $region14: #{tpu_custom_call.1} parent=1 // pred_check
      _
    $region15: #{tpu_custom_call.1} parent=1 // pred_check_branch
      %673 = sbr.rel (0) target = $region17
    $region16: #{tpu_custom_call.1} parent=1 // pred_region
      _
    $region17: #{tpu_custom_call.1} parent=1 // pred_fallthru
      _
    %674 = vsyncpa [#allocation3], 1

</llo_original>
